<compile_context>
chip_gen: v6e
topology: v6e:2x2x1
jax: 0.10.0
libtpu: 0.0.40
codegen_flags: <defaults>
</compile_context>

<pallas_src>
import math

import jax
import jax.numpy as jnp
from jax import lax
from jax.experimental import pallas as pl
from jax.experimental.pallas import tpu as pltpu


def _round_up(x, m):
    return (x + m - 1) // m * m


def _round_down(x, m):
    return (x // m) * m


def _mlp_kernel(x_ref, w1_ref, b1_ref, w2_ref, b2_ref, o_ref):
    # Layer 1 on the MXU: (TM, D) bf16 @ (D, Hp) bf16 -> (TM, Hp) with f32 accumulation.
    h = jnp.dot(x_ref[...], w1_ref[...], preferred_element_type=jnp.float32)
    h = jnp.maximum(h + b1_ref[...], 0.0)                      # bias + ReLU on the VPU
    # Layer 2: contract the shared hidden (lane) axis of the (8, Hp) w2 block and the
    # (TM, Hp) activation ("qd,kd->qk" form).  The MXU absorbs the batch->lane
    # transpose, so there is no (TM, Hp) XLU transpose and no big f32 VMEM temporaries;
    # the result is already lane-dense along the batch axis.  Row 0 of w2_ref is the
    # real w2, rows 1..7 and columns H..Hp are exactly zero.
    y = lax.dot_general(w2_ref[...], h, (((1,), (1,)), ((), ())),
                        preferred_element_type=jnp.float32)     # (8, TM) f32
    o_ref[...] = (y[0:1, :] + b2_ref[0]).astype(o_ref.dtype)    # dense (1, TM) store


def binary_classifier_forward(x, w1, b1, w2, b2):
    """Forward pass: relu(x @ w1.T + b1) @ w2.T + b2.

    x: (B, D). w1: (5, D) (PyTorch out x in layout). b1: (5,). w2: (1, 5). b2: (1,).
    Returns (B, 1) float32.
    """
    B, D = x.shape
    H = w1.shape[0]                        # 5
    H_pad = max(128, _round_up(H, 128))    # keep 128: wider buys nothing (mem-bound)

    # --- x: cast only if needed; no full-array pad -------------------------------
    x_bf = x if x.dtype == jnp.bfloat16 else jnp.asarray(x, jnp.float32).astype(jnp.bfloat16)
    if B < 128:
        # Tiny batches: pad up to one 128-row tile (copies < 128 rows, negligible).
        x_bf = jnp.pad(x_bf, ((0, 128 - B), (0, 0)))
        B_pad = 128
    else:
        B_pad = B                          # partial last tile handled by Pallas masking

    # --- batch tile sizing --------------------------------------------------------
    # per-row VMEM: 2x bf16 x double-buffer + f32 h / y / output double-buffer slack.
    bytes_per_row = 2 * 2 * D + 1152
    # fixed VMEM: double-buffered bf16 W1 slab + small (b1/w2/out-of-band) operands.
    fixed_bytes = 2 * 2 * D * H_pad + (64 << 10)
    vmem_budget = 40 << 20                                   # working-set target
    tm_traffic = (6 << 20) // max(1, 2 * D)                  # ~6 MiB bf16 x tile
    tm_vmem = max(0, vmem_budget - fixed_bytes) // bytes_per_row
    TM = max(128, _round_down(min(tm_traffic, tm_vmem, 8192), 128))
    TM = min(TM, _round_down(B_pad, 128))                    # block <= array extent
    # v7x has 2 TensorCores: make sure the "parallel" batch axis has >= 2 steps.
    if (B_pad + TM - 1) // TM < 2 and B_pad >= 256:
        TM = max(128, _round_down(B_pad // 2, 128))
    grid = ((B_pad + TM - 1) // TM,)

    # --- small weight operands (one-time, tiny) -----------------------------------
    w1_t = jnp.zeros((D, H_pad), jnp.float32).at[:, :H].set(
        jnp.asarray(w1, jnp.float32).T).astype(jnp.bfloat16)     # (D, Hp) bf16
    b1_r = jnp.zeros((1, H_pad), jnp.float32).at[0, :H].set(
        jnp.asarray(b1, jnp.float32))                            # (1, Hp) f32
    w2_r = jnp.zeros((8, H_pad), jnp.float32).at[0, :H].set(
        jnp.asarray(w2, jnp.float32).reshape(H))                 # (8, Hp) f32, row 0 real
    b2_s = jnp.asarray(b2, jnp.float32).reshape(1)               # SMEM scalar

    vmem_limit = fixed_bytes + bytes_per_row * TM + (8 << 20)    # + headroom
    vmem_limit = int(min(max(vmem_limit, 32 << 20), 48 << 20))   # <= 48 MiB: safe on v7x

    out = pl.pallas_call(
        _mlp_kernel,
        out_shape=jax.ShapeDtypeStruct((1, B_pad), jnp.float32),
        grid=grid,
        in_specs=[
            pl.BlockSpec((TM, D), lambda i: (i, 0)),             # x: streamed batch tiles
            pl.BlockSpec((D, H_pad), lambda i: (0, 0)),          # W1: VMEM-resident
            pl.BlockSpec((1, H_pad), lambda i: (0, 0)),          # b1: VMEM-resident
            pl.BlockSpec((8, H_pad), lambda i: (0, 0)),          # w2 block: VMEM-resident
            pl.BlockSpec(memory_space=pltpu.MemorySpace.SMEM),   # b2: scalar in SMEM
        ],
        out_specs=pl.BlockSpec((1, TM), lambda i: (0, i)),       # lane-dense output tile
        compiler_params=pltpu.CompilerParams(
            dimension_semantics=("parallel",),                   # batch axis is parallel
            vmem_limit_bytes=vmem_limit,
        ),
    )(x_bf, w1_t, b1_r, w2_r, b2_s)

    return out[0, :B].reshape(B, 1)


def init_params(input_size, key):
    """Deterministic re-implementation of BinaryClassifier.init_weights()."""
    k1, k2 = jax.random.split(key)
    # layer1: xavier_uniform_ on weight (5, input_size), bias = 0.1
    fan_in1, fan_out1 = input_size, 5
    bound1 = math.sqrt(6.0 / (fan_in1 + fan_out1))
    w1 = jax.random.uniform(k1, (5, input_size), jnp.float32, -bound1, bound1)
    b1 = jnp.full((5,), 0.1, jnp.float32)
    # layer2: kaiming_uniform_(nonlinearity='sigmoid') -> gain=1, bound=sqrt(3/fan_in)
    fan_in2 = 5
    bound2 = math.sqrt(3.0 / fan_in2)
    w2 = jax.random.uniform(k2, (1, 5), jnp.float32, -bound2, bound2)
    b2 = jnp.full((1,), 0.1, jnp.float32)
    return w1, b1, w2, b2


if __name__ == "__main__":
    key = jax.random.PRNGKey(0)
    k_x, k_p = jax.random.split(key)

    batch, input_size = 8, 16
    x = jax.random.normal(k_x, (batch, input_size), jnp.float32)
    w1, b1, w2, b2 = init_params(input_size, k_p)

    out = binary_classifier_forward(x, w1, b1, w2, b2)
    out = jax.block_until_ready(out)
    assert out.shape == (batch, 1)

    # Reference matched to the kernel's bf16 x / W1 casts (f32 accumulation); layer 2
    # tolerance is slightly loose to absorb the f32 MXU contraction's rounding mode.
    ref_bf = jnp.maximum(
        jnp.dot(x.astype(jnp.bfloat16), w1.T.astype(jnp.bfloat16),
                preferred_element_type=jnp.float32) + b1, 0.0) @ w2.T + b2
    # Pure-f32 PyTorch-equivalent reference (loose: accounts for bf16 quantization).
    ref_f32 = jnp.maximum(x @ w1.T + b1, 0.0) @ w2.T + b2

    assert jnp.allclose(out, ref_bf, atol=1e-3, rtol=1e-3)
    assert jnp.allclose(out, ref_f32, atol=1e-1, rtol=1e-1)

    print("KERNEL_OK")
</pallas_src>

<mosaic_0001>
module attributes {stable_mosaic.version = 11 : i64} {
  func.func @_mlp_kernel(%arg0: i32, %arg1: memref<128x16xbf16, #tpu.memory_space<vmem>>, %arg2: memref<16x128xbf16, #tpu.memory_space<vmem>>, %arg3: memref<1x128xf32, #tpu.memory_space<vmem>>, %arg4: memref<8x128xf32, #tpu.memory_space<vmem>>, %arg5: memref<1xf32, #tpu.memory_space<smem>>, %arg6: memref<1x128xf32, #tpu.memory_space<vmem>>) attributes {dimension_semantics = [#tpu.dimension_semantics<parallel>], iteration_bounds = array<i64: 1>, scalar_prefetch = 0 : i64, scratch_operands = 0 : i64, tpu.core_type = #tpu.core_type<tc>, window_params = [{transform_indices = @transform_0, window_bounds = array<i64: 128, 16>}, {pipeline_mode = #tpu.pipeline_mode<synchronous>, transform_indices = @transform_1, window_bounds = array<i64: 16, 128>}, {pipeline_mode = #tpu.pipeline_mode<synchronous>, transform_indices = @transform_2, window_bounds = array<i64: 1, 128>}, {pipeline_mode = #tpu.pipeline_mode<synchronous>, transform_indices = @transform_3, window_bounds = array<i64: 8, 128>}, {transform_indices = @transform_4, window_bounds = array<i64: 1>}, {transform_indices = @transform_5, window_bounds = array<i64: 1, 128>}]} {
    %c0 = arith.constant 0 : index
    %c0_0 = arith.constant 0 : index
    %0 = vector.load %arg1[%c0, %c0_0] : memref<128x16xbf16, #tpu.memory_space<vmem>>, vector<128x16xbf16>
    %c0_1 = arith.constant 0 : index
    %c0_2 = arith.constant 0 : index
    %1 = vector.load %arg2[%c0_1, %c0_2] : memref<16x128xbf16, #tpu.memory_space<vmem>>, vector<16x128xbf16>
    %cst = arith.constant dense<0.000000e+00> : vector<128x128xf32>
    %2 = tpu.matmul %0, %1, %cst {dimension_numbers = #tpu.dot_dimension_numbers<[1], [0], [0], [1], [0, 0, 1, 1], [], []>} : vector<128x16xbf16>, vector<16x128xbf16>, vector<128x128xf32> -> vector<128x128xf32>
    %c0_3 = arith.constant 0 : index
    %c0_4 = arith.constant 0 : index
    %3 = vector.load %arg3[%c0_3, %c0_4] : memref<1x128xf32, #tpu.memory_space<vmem>>, vector<1x128xf32>
    %4 = vector.broadcast %3 : vector<1x128xf32> to vector<128x128xf32>
    %5 = arith.addf %2, %4 : vector<128x128xf32>
    %cst_5 = arith.constant 0.000000e+00 : f32
    %6 = vector.broadcast %cst_5 : f32 to vector<128x128xf32>
    %7 = arith.maximumf %5, %6 : vector<128x128xf32>
    %c0_6 = arith.constant 0 : index
    %c0_7 = arith.constant 0 : index
    %8 = vector.load %arg4[%c0_6, %c0_7] : memref<8x128xf32, #tpu.memory_space<vmem>>, vector<8x128xf32>
    %cst_8 = arith.constant dense<0.000000e+00> : vector<8x128xf32>
    %9 = tpu.matmul %8, %7, %cst_8 {dimension_numbers = #tpu.dot_dimension_numbers<[1], [1], [0], [0], [0, 0, 1, 0], [], []>} : vector<8x128xf32>, vector<128x128xf32>, vector<8x128xf32> -> vector<8x128xf32>
    %10 = vector.extract_strided_slice %9 {offsets = [0, 0], sizes = [1, 128], strides = [1, 1]} : vector<8x128xf32> to vector<1x128xf32>
    %c0_9 = arith.constant 0 : index
    %11 = memref.load %arg5[%c0_9] : memref<1xf32, #tpu.memory_space<smem>>
    %12 = vector.broadcast %11 : f32 to vector<1x128xf32>
    %13 = arith.addf %10, %12 : vector<1x128xf32>
    %c0_10 = arith.constant 0 : index
    %c0_11 = arith.constant 0 : index
    %14 = vector.load %arg6[%c0_10, %c0_11] : memref<1x128xf32, #tpu.memory_space<vmem>>, vector<1x128xf32>
    tpu.vector_store %arg6[%c0_10, %c0_11], %13 {strides = array<i32>} : memref<1x128xf32, #tpu.memory_space<vmem>>, vector<1x128xf32>,
    return
  }
  func.func @transform_0(%arg0: i32) -> (i32, i32) {
    %c0_i32 = arith.constant 0 : i32
    %c0_i32_0 = arith.constant 0 : i32
    return %arg0, %c0_i32 : i32, i32
  }
  func.func @transform_1(%arg0: i32) -> (i32, i32) {
    %c0_i32 = arith.constant 0 : i32
    %c0_i32_0 = arith.constant 0 : i32
    %c0_i32_1 = arith.constant 0 : i32
    return %c0_i32, %c0_i32_0 : i32, i32
  }
  func.func @transform_2(%arg0: i32) -> (i32, i32) {
    %c0_i32 = arith.constant 0 : i32
    %c0_i32_0 = arith.constant 0 : i32
    %c0_i32_1 = arith.constant 0 : i32
    return %c0_i32, %c0_i32_0 : i32, i32
  }
  func.func @transform_3(%arg0: i32) -> (i32, i32) {
    %c0_i32 = arith.constant 0 : i32
    %c0_i32_0 = arith.constant 0 : i32
    %c0_i32_1 = arith.constant 0 : i32
    return %c0_i32, %c0_i32_0 : i32, i32
  }
  func.func @transform_4(%arg0: i32) -> i32 {
    %c0_i32 = arith.constant 0 : i32
    %c0_i32_0 = arith.constant 0 : i32
    return %c0_i32 : i32
  }
  func.func @transform_5(%arg0: i32) -> (i32, i32) {
    %c0_i32 = arith.constant 0 : i32
    %c0_i32_0 = arith.constant 0 : i32
    return %c0_i32, %arg0 : i32, i32
  }
}

</mosaic_0001>

<llo_original>
// kernel: tpu_custom_call.1
$region0: #{tpu_custom_call.1}
  #allocation0 [shape = 'u32[]', space=smem, size = 0x4, offset = 0x4, fixed_abs, tag = 'smem constant byte address 0x4 - core index']
  #allocation1 [shape = 'u32[144,128]{1,0:T(1,128)}', space=vmem, size = 0x12000, scoped, tag = 'internal scratch']
  #allocation2 [shape = 'f32[1]{0:T(128)S(6)}', space=smem, size = 0x200, scoped, tag = 'scoped memory for tpu_custom_call.1']
  %s0 = inlined_call_operand.vmem [shape: bf16[128,16], index: 0, kind: input, shape index: {}]
  %s1 = inlined_call_operand.vmem [shape: bf16[16,128], index: 1, kind: input, shape index: {}]
  %s2 = inlined_call_operand.vmem [shape: f32[1,128], index: 2, kind: input, shape index: {}]
  %s3 = inlined_call_operand.vmem [shape: f32[8,128], index: 3, kind: input, shape index: {}]
  %s4 = inlined_call_operand.<no memory space> [shape: f32[1], index: 4, kind: input, shape index: {}]
  %s5 = inlined_call_operand.hbm [shape: f32[1,128], index: 5, kind: output, shape index: {}]
  %s6 = sld [smem:[#allocation0]]
  $region30: #{tpu_custom_call.1} parent=0
    _
  %s8 = ssub.s32 1, %s6
  %s9 = scalar_select 0, %s8, %s6
  %10 = sst [smem:[#allocation2]] %s4
  $region1: #{tpu_custom_call.1} parent=0
    #allocation3 [shape = 'u8[512]{0}', space=vmem, size = 0x400, scoped, tag = 'output window, operand 0, single buffered']
    #allocation4 [shape = 's32[1]{0}', space=sflag, size = 0x4, scoped, tag = 'scoped memory for tpu_custom_call.1']
    %11 = vsyncpa [#allocation4], 0
    // Predicated region
    $region2: #{tpu_custom_call.1} parent=1 // pred_check
      _
    $region3: #{tpu_custom_call.1} parent=1 // pred_check_branch
      %13 = sbr.rel (0) target = $region5
    $region4: #{tpu_custom_call.1} parent=1 // pred_region
      _
    $region5: #{tpu_custom_call.1} parent=1 // pred_fallthru
      _
    // Predicated region
    $region6: #{tpu_custom_call.1} parent=1 // pred_check
      _
    $region7: #{tpu_custom_call.1} parent=1 // pred_check_branch
      %15 = sbr.rel (0) target = $region9
    $region8: #{tpu_custom_call.1} parent=1 // pred_region
      _
    $region9: #{tpu_custom_call.1} parent=1 // pred_fallthru
      _
    // Predicated region
    $region10: #{tpu_custom_call.1} parent=1 // pred_check
      _
    $region11: #{tpu_custom_call.1} parent=1 // pred_check_branch
      %17 = sbr.rel (0) target = $region13
    $region12: #{tpu_custom_call.1} parent=1 // pred_region
      _
    $region13: #{tpu_custom_call.1} parent=1 // pred_fallthru
      _
    // Predicated region
    $region14: #{tpu_custom_call.1} parent=1 // pred_check
      _
    $region15: #{tpu_custom_call.1} parent=1 // pred_check_branch
      %19 = sbr.rel (0) target = $region17
    $region16: #{tpu_custom_call.1} parent=1 // pred_region
      _
    $region17: #{tpu_custom_call.1} parent=1 // pred_fallthru
      _
    // Predicated region
    $region18: #{tpu_custom_call.1} parent=1 // pred_check
      _
    $region19: #{tpu_custom_call.1} parent=1 // pred_check_branch
      %21 = sbr.rel (0) target = $region21
    $region20: #{tpu_custom_call.1} parent=1 // pred_region
      _
    $region21: #{tpu_custom_call.1} parent=1 // pred_fallthru
      _
    %v23 = vld [vmem:[%s0] sm:$0xf]
    %v24 = vld [vmem:[%s0 + $0x4] sm:$0xf]
    %v25 = vld [vmem:[%s0 + $0x8] sm:$0xf]
    %v26 = vld [vmem:[%s0 + $0xc] sm:$0xf]
    %v27 = vld [vmem:[%s0 + $0x10] sm:$0xf]
    %v28 = vld [vmem:[%s0 + $0x14] sm:$0xf]
    %v29 = vld [vmem:[%s0 + $0x18] sm:$0xf]
    %v30 = vld [vmem:[%s0 + $0x1c] sm:$0xf]
    %v31 = vld [vmem:[%s0 + $0x20] sm:$0xf]
    %v32 = vld [vmem:[%s0 + $0x24] sm:$0xf]
    %v33 = vld [vmem:[%s0 + $0x28] sm:$0xf]
    %v34 = vld [vmem:[%s0 + $0x2c] sm:$0xf]
    %v35 = vld [vmem:[%s0 + $0x30] sm:$0xf]
    %v36 = vld [vmem:[%s0 + $0x34] sm:$0xf]
    %v37 = vld [vmem:[%s0 + $0x38] sm:$0xf]
    %v38 = vld [vmem:[%s0 + $0x3c] sm:$0xf]
    %v39 = vld [vmem:[%s1] sm:$0xf]
    %v40 = vld [vmem:[%s1 + $0x4] sm:$0xf]
    %v41 = vld [vmem:[%s2] sm:$0x1]
    %v43 = vlaneseq
    %v44 = vshrl.u32 %v43, 7
    %v45 = vsub.s32 0, %v44
    %v46 = vrot.slane %v41, %v45
    %v64 = vunpack.c.l.b16 %v23
    %v65 = vunpack.c.l.b16 %v24
    %v66 = vunpack.c.l.b16 %v25
    %v67 = vunpack.c.l.b16 %v26
    %v68 = vunpack.c.l.b16 %v27
    %v69 = vunpack.c.l.b16 %v28
    %v70 = vunpack.c.l.b16 %v29
    %v71 = vunpack.c.l.b16 %v30
    %v72 = vunpack.c.l.b16 %v31
    %v73 = vunpack.c.l.b16 %v32
    %v74 = vunpack.c.l.b16 %v33
    %v75 = vunpack.c.l.b16 %v34
    %v76 = vunpack.c.l.b16 %v35
    %v77 = vunpack.c.l.b16 %v36
    %v78 = vunpack.c.l.b16 %v37
    %v79 = vunpack.c.l.b16 %v38
    %v80 = vpack.c.b16 %v65, %v64
    %v81 = vpack.c.b16 %v67, %v66
    %v82 = vpack.c.b16 %v69, %v68
    %v83 = vpack.c.b16 %v71, %v70
    %v84 = vpack.c.b16 %v73, %v72
    %v85 = vpack.c.b16 %v75, %v74
    %v86 = vpack.c.b16 %v77, %v76
    %v87 = vpack.c.b16 %v79, %v78
    %v90 = vunpack.c.l.b16 %v39
    %v91 = vunpack.c.l.b16 %v40
    %v92 = vpack.c.b16 %v91, %v90
    %vm94 = vcmask 130048
    %v96 = vsel %vm94, %v80, 0
    %v99 = vsel %vm94, %v81, 0
    %v102 = vsel %vm94, %v82, 0
    %v105 = vsel %vm94, %v83, 0
    %v108 = vsel %vm94, %v84, 0
    %v111 = vsel %vm94, %v85, 0
    %v114 = vsel %vm94, %v86, 0
    %v117 = vsel %vm94, %v87, 0
    %119 = vmatprep.subr.bf16.mxu0 0
    %120 = vmatpush1.bf16.msra.mxu0 0
    %121 = vmatprep.subr.bf16.mxu0 0
    %122 = vmatpush1.bf16.msra.mxu0 0
    %123 = vmatprep.subr.bf16.mxu0 0
    %124 = vmatpush1.bf16.msra.mxu0 0
    %125 = vmatprep.subr.bf16.mxu0 0
    %126 = vmatpush1.bf16.msra.mxu0 0
    %127 = vmatprep.subr.bf16.mxu0 0
    %128 = vmatpush1.bf16.msra.mxu0 0
    %129 = vmatprep.subr.bf16.mxu0 0
    %130 = vmatpush1.bf16.msra.mxu0 0
    %131 = vmatprep.subr.bf16.mxu0 0
    %132 = vmatpush1.bf16.msra.mxu0 0
    %133 = vmatprep.subr.bf16.mxu0 0
    %134 = vmatpush1.bf16.msra.mxu0 %v92
    %135 = vmatprep.subr.bf16.mxu0 0
    %136 = vmatpush2.bf16.msra.mxu0 0
    %137 = vmatprep.subr.bf16.mxu0 0
    %138 = vmatpush2.bf16.msra.mxu0 0
    %139 = vmatprep.subr.bf16.mxu0 0
    %140 = vmatpush2.bf16.msra.mxu0 0
    %141 = vmatprep.subr.bf16.mxu0 0
    %142 = vmatpush2.bf16.msra.mxu0 0
    %143 = vmatprep.subr.bf16.mxu0 0
    %144 = vmatpush2.bf16.msra.mxu0 0
    %145 = vmatprep.subr.bf16.mxu0 0
    %146 = vmatpush2.bf16.msra.mxu0 0
    %147 = vmatprep.subr.bf16.mxu0 0
    %148 = vmatpush2.bf16.msra.mxu0 0
    %149 = vmatprep.subr.bf16.mxu0 0
    %150 = vmatpush2.bf16.msra.mxu0 0
    %151 = vmatprep.mubr.bf16.mxu0 0
    %152 = vmatmul.mubr.bf16.gmra.mxu0 %v96
    %v153 = vpop.f32.mrf.mxu0
    %v154 = vadd.f32 %v46, %v153
    %v155 = vpop.f32.mrf.mxu0
    %v156 = vpop.f32.mrf.mxu0
    %v157 = vadd.f32 %v46, %v156
    %v158 = vpop.f32.mrf.mxu0
    %159 = vmatprep.mubr.bf16.mxu0 0
    %160 = vmatmul.mubr.bf16.gmra.mxu0 %v99
    %v161 = vpop.f32.mrf.mxu0
    %v162 = vadd.f32 %v46, %v161
    %v163 = vpop.f32.mrf.mxu0
    %v164 = vpop.f32.mrf.mxu0
    %v165 = vadd.f32 %v46, %v164
    %v166 = vpop.f32.mrf.mxu0
    %167 = vmatprep.mubr.bf16.mxu0 0
    %168 = vmatmul.mubr.bf16.gmra.mxu0 %v102
    %v169 = vpop.f32.mrf.mxu0
    %v170 = vadd.f32 %v46, %v169
    %v171 = vpop.f32.mrf.mxu0
    %v172 = vpop.f32.mrf.mxu0
    %v173 = vadd.f32 %v46, %v172
    %v174 = vpop.f32.mrf.mxu0
    %175 = vmatprep.mubr.bf16.mxu0 0
    %176 = vmatmul.mubr.bf16.gmra.mxu0 %v105
    %v177 = vpop.f32.mrf.mxu0
    %v178 = vadd.f32 %v46, %v177
    %v179 = vpop.f32.mrf.mxu0
    %v180 = vpop.f32.mrf.mxu0
    %v181 = vadd.f32 %v46, %v180
    %v182 = vpop.f32.mrf.mxu0
    %183 = vmatprep.mubr.bf16.mxu0 0
    %184 = vmatmul.mubr.bf16.gmra.mxu0 %v108
    %v185 = vpop.f32.mrf.mxu0
    %v186 = vadd.f32 %v46, %v185
    %v187 = vpop.f32.mrf.mxu0
    %v188 = vpop.f32.mrf.mxu0
    %v189 = vadd.f32 %v46, %v188
    %v190 = vpop.f32.mrf.mxu0
    %191 = vmatprep.mubr.bf16.mxu0 0
    %192 = vmatmul.mubr.bf16.gmra.mxu0 %v111
    %v193 = vpop.f32.mrf.mxu0
    %v194 = vadd.f32 %v46, %v193
    %v195 = vpop.f32.mrf.mxu0
    %v196 = vpop.f32.mrf.mxu0
    %v197 = vadd.f32 %v46, %v196
    %v198 = vpop.f32.mrf.mxu0
    %199 = vmatprep.mubr.bf16.mxu0 0
    %200 = vmatmul.mubr.bf16.gmra.mxu0 %v114
    %v201 = vpop.f32.mrf.mxu0
    %v202 = vadd.f32 %v46, %v201
    %v203 = vpop.f32.mrf.mxu0
    %v204 = vpop.f32.mrf.mxu0
    %v205 = vadd.f32 %v46, %v204
    %v206 = vpop.f32.mrf.mxu0
    %207 = vmatprep.mubr.bf16.mxu0 0
    %208 = vmatmul.mubr.bf16.gmra.mxu0 %v117
    %v209 = vpop.f32.mrf.mxu0
    %v210 = vadd.f32 %v46, %v209
    %v211 = vpop.f32.mrf.mxu0
    %v212 = vpop.f32.mrf.mxu0
    %v213 = vadd.f32 %v46, %v212
    %v214 = vpop.f32.mrf.mxu0
    %215 = vdwg.mxu0
    %v216 = vmax.f32 %v154, 0.0
    %v217 = vmax.f32 %v157, 0.0
    %v218 = vmax.f32 %v162, 0.0
    %v219 = vmax.f32 %v165, 0.0
    %v220 = vmax.f32 %v170, 0.0
    %v221 = vmax.f32 %v173, 0.0
    %v222 = vmax.f32 %v178, 0.0
    %v223 = vmax.f32 %v181, 0.0
    %v224 = vmax.f32 %v186, 0.0
    %v225 = vmax.f32 %v189, 0.0
    %v226 = vmax.f32 %v194, 0.0
    %v227 = vmax.f32 %v197, 0.0
    %v228 = vmax.f32 %v202, 0.0
    %v229 = vmax.f32 %v205, 0.0
    %v230 = vmax.f32 %v210, 0.0
    %v231 = vmax.f32 %v213, 0.0
    %v232 = vld [vmem:[%s3] sm:$0xff]
    %233 = vmatprep.subr.mxu0 0.0
    %234 = vmatpush1.xpose.msra.mxu0 %v231
    %235 = vmatprep.subr.mxu0 0.0
    %236 = vmatpush1.xpose.msra.mxu0 %v230
    %237 = vmatprep.subr.mxu0 0.0
    %238 = vmatpush1.xpose.msra.mxu0 %v229
    %239 = vmatprep.subr.mxu0 0.0
    %240 = vmatpush1.xpose.msra.mxu0 %v228
    %241 = vmatprep.subr.mxu0 0.0
    %242 = vmatpush1.xpose.msra.mxu0 %v227
    %243 = vmatprep.subr.mxu0 0.0
    %244 = vmatpush1.xpose.msra.mxu0 %v226
    %245 = vmatprep.subr.mxu0 0.0
    %246 = vmatpush1.xpose.msra.mxu0 %v225
    %247 = vmatprep.subr.mxu0 0.0
    %248 = vmatpush1.xpose.msra.mxu0 %v224
    %249 = vmatprep.subr.mxu0 0.0
    %250 = vmatpush1.xpose.msra.mxu0 %v223
    %251 = vmatprep.subr.mxu0 0.0
    %252 = vmatpush1.xpose.msra.mxu0 %v222
    %253 = vmatprep.subr.mxu0 0.0
    %254 = vmatpush1.xpose.msra.mxu0 %v221
    %255 = vmatprep.subr.mxu0 0.0
    %256 = vmatpush1.xpose.msra.mxu0 %v220
    %257 = vmatprep.subr.mxu0 0.0
    %258 = vmatpush1.xpose.msra.mxu0 %v219
    %259 = vmatprep.subr.mxu0 0.0
    %260 = vmatpush1.xpose.msra.mxu0 %v218
    %261 = vmatprep.subr.mxu0 0.0
    %262 = vmatpush1.xpose.msra.mxu0 %v217
    %263 = vmatprep.subr.mxu0 0.0
    %264 = vmatpush1.xpose.msra.mxu0 %v216
    %265 = vmatprep.subr.mxu0 0.0
    %266 = vmatpush2.xpose.msra.mxu0 0.0
    %267 = vmatprep.subr.mxu0 0.0
    %268 = vmatpush2.xpose.msra.mxu0 0.0
    %269 = vmatprep.subr.mxu0 0.0
    %270 = vmatpush2.xpose.msra.mxu0 0.0
    %271 = vmatprep.subr.mxu0 0.0
    %272 = vmatpush2.xpose.msra.mxu0 0.0
    %273 = vmatprep.subr.mxu0 0.0
    %274 = vmatpush2.xpose.msra.mxu0 0.0
    %275 = vmatprep.subr.mxu0 0.0
    %276 = vmatpush2.xpose.msra.mxu0 0.0
    %277 = vmatprep.subr.mxu0 0.0
    %278 = vmatpush2.xpose.msra.mxu0 0.0
    %279 = vmatprep.subr.mxu0 0.0
    %280 = vmatpush2.xpose.msra.mxu0 0.0
    %281 = vmatprep.subr.mxu0 0.0
    %282 = vmatpush2.xpose.msra.mxu0 0.0
    %283 = vmatprep.subr.mxu0 0.0
    %284 = vmatpush2.xpose.msra.mxu0 0.0
    %285 = vmatprep.subr.mxu0 0.0
    %286 = vmatpush2.xpose.msra.mxu0 0.0
    %287 = vmatprep.subr.mxu0 0.0
    %288 = vmatpush2.xpose.msra.mxu0 0.0
    %289 = vmatprep.subr.mxu0 0.0
    %290 = vmatpush2.xpose.msra.mxu0 0.0
    %291 = vmatprep.subr.mxu0 0.0
    %292 = vmatpush2.xpose.msra.mxu0 0.0
    %293 = vmatprep.subr.mxu0 0.0
    %294 = vmatpush2.xpose.msra.mxu0 0.0
    %295 = vmatprep.subr.mxu0 0.0
    %296 = vmatpush2.xpose.msra.mxu0 0.0
    %297 = vmatprep.mubr.f32.mxu0 0.0
    %298 = vmatmul.mubr.f32.gmra.mxu0 %v232
    %v299 = vpop.f32.mrf.mxu0
    %v300 = vadd.f32 0.0, %v299
    %v301 = vpop.f32.mrf.mxu0
    %302 = vdwg.mxu0
    %s303 = sld [smem:[#allocation2]]
    %v304 = vstv %s303
    %v305 = vadd.f32 %v300, %v304
    %306 = vst [vmem:[#allocation3] sm:$0x1] %v305
    // Predicated region
    $region22: #{tpu_custom_call.1} parent=1 // pred_check
      _
    $region23: #{tpu_custom_call.1} parent=1 // pred_check_branch
      %308 = sbr.rel (0) target = $region25
    $region24: #{tpu_custom_call.1} parent=1 // pred_region
      %s310 = ssub.s32 16, 16
      %311 = vsyncadd [#allocation4], %s310
      %s313 = sshll.u32 [#allocation3], 4
      %s314 = int_to_ptr.vmem [resolvable:$true] %s313
      %316 = dma.vmem_to_hbm [thread:$0]  %s314, 16, %s5, [#allocation4]
    $region25: #{tpu_custom_call.1} parent=1 // pred_fallthru
      _
    // Predicated region
    $region26: #{tpu_custom_call.1} parent=1 // pred_check
      _
    $region27: #{tpu_custom_call.1} parent=1 // pred_check_branch
      %318 = sbr.rel (0) target = $region29
    $region28: #{tpu_custom_call.1} parent=1 // pred_region
      %319 = dma.done [#allocation4], 16
    $region29: #{tpu_custom_call.1} parent=1 // pred_fallthru
      _
    %320 = vsyncpa [#allocation4], 1

</llo_original>
